<compile_context>
chip_gen: v6e
topology: v6e:2x2x1
jax: 0.10.0
libtpu: 0.0.40
codegen_flags: <defaults>
</compile_context>

<pallas_src>
import functools

import jax
import jax.numpy as jnp
from jax.experimental import pallas as pl
from jax.experimental.pallas import tpu as pltpu


def _mtl_kernel_none(losses_ref, a_ref, b_ref, out_ref):
    # out = losses * a + b     (a = coeffs, b = log(stds)), computed in f32.
    losses = losses_ref[...].astype(jnp.float32)      # (1, n)
    out_ref[...] = (losses * a_ref[...] + b_ref[...]).astype(out_ref.dtype)


def _mtl_kernel_reduce(losses_ref, a_ref, b_ref, out_ref, *, scale):
    losses = losses_ref[...].astype(jnp.float32)      # (1, n)
    mtl = losses * a_ref[...] + b_ref[...]
    # `scale` = 1/n_tasks for 'mean', 1.0 for 'sum'.  Scalar lands in SMEM.
    out_ref[0, 0] = jnp.sum(mtl) * scale


class MultiTaskLossPallas:
    """JAX/Pallas port of the PyTorch MultiTaskLoss forward."""

    def __init__(self, is_regression, reduction="none"):
        is_regression = jnp.asarray(is_regression, dtype=jnp.float32)
        self.n_tasks = int(is_regression.shape[0])
        self.reduction = reduction
        self._inv_reg = (1.0 / (is_regression + 1.0)).reshape(1, self.n_tasks)
        # Parameter init matches torch.zeros(n_tasks).
        # TODO(synk): log_vars is a learnable nn.Parameter in torch; autograd /
        # optimizer state is out of scope here.  Training code must call
        # set_log_vars() after each update so the folded constants are rebuilt.
        self.log_vars = jnp.zeros((self.n_tasks,), dtype=jnp.float32)
        self._rebuild_consts()
        self._fn_cache = {}

    # --- parameter handling -------------------------------------------------
    def set_log_vars(self, log_vars):
        self.log_vars = jnp.asarray(log_vars, dtype=jnp.float32).reshape(
            (self.n_tasks,)
        )
        self._rebuild_consts()

    def _rebuild_consts(self):
        lv = self.log_vars.reshape(1, self.n_tasks)
        # coeffs = 1/((is_reg+1)*exp(lv)) ; log(stds) = 0.5*lv  (exact algebra)
        self._a = jnp.exp(-lv) * self._inv_reg
        self._b = 0.5 * lv

    # --- compiled-callable cache ---------------------------------------------
    def _get_fn(self, dtype):
        key = jnp.dtype(dtype).name
        fn = self._fn_cache.get(key)
        if fn is not None:
            return fn

        n = self.n_tasks
        # Full-array blocks: block_shape == array dims, so no (8,128) padding
        # is required on the spec and no wrapper-side pad exists.
        full = pl.BlockSpec((1, n), lambda: (0, 0))
        in_specs = [full, full, full]

        if self.reduction == "none":
            fn = pl.pallas_call(
                _mtl_kernel_none,
                out_shape=jax.ShapeDtypeStruct((1, n), dtype),
                grid=(),
                in_specs=in_specs,
                out_specs=pl.BlockSpec((1, n), lambda: (0, 0)),
                cost_estimate=pl.CostEstimate(
                    flops=2 * n, transcendentals=0, bytes_accessed=4 * 4 * n
                ),
            )
        else:
            scale = (1.0 / n) if self.reduction == "mean" else 1.0
            fn = pl.pallas_call(
                functools.partial(_mtl_kernel_reduce, scale=scale),
                out_shape=jax.ShapeDtypeStruct((1, 1), jnp.float32),
                grid=(),
                in_specs=in_specs,
                out_specs=pl.BlockSpec(memory_space=pltpu.MemorySpace.SMEM),
                cost_estimate=pl.CostEstimate(
                    flops=3 * n, transcendentals=0, bytes_accessed=3 * 4 * n + 4
                ),
            )
        self._fn_cache[key] = fn
        return fn

    # --- forward --------------------------------------------------------------
    def __call__(self, losses):
        dtype = losses.dtype
        n = self.n_tasks
        fn = self._get_fn(dtype)
        out = fn(losses.reshape(1, n), self._a, self._b)
        if self.reduction == "none":
            return out[0, :]
        return out[0, 0].astype(dtype)


def _reference(losses, log_vars, is_regression):
    """Pure-JAX reference mirroring the PyTorch forward (reduction='none')."""
    stds = jnp.exp(log_vars) ** 0.5
    coeffs = 1.0 / ((is_regression + 1.0) * stds ** 2)
    return coeffs * losses + jnp.log(stds)


if __name__ == "__main__":
    key = jax.random.PRNGKey(0)
    k_loss, k_lv = jax.random.split(key)

    n_tasks = 4
    # Two regression tasks, two classification tasks.
    is_regression = jnp.array([1.0, 1.0, 0.0, 0.0], dtype=jnp.float32)

    # Synthetic per-task losses (non-negative, like real loss values).
    losses = jax.random.uniform(k_loss, (n_tasks,), dtype=jnp.float32) * 2.0

    # --- reduction='none' with default (zero) log_vars ---
    mtl = MultiTaskLossPallas(is_regression, reduction="none")
    out_none = jax.block_until_ready(mtl(losses))
    ref = _reference(losses, mtl.log_vars, is_regression)
    assert out_none.shape == (n_tasks,)
    assert jnp.allclose(out_none, ref, atol=1e-6, rtol=1e-6)

    # --- non-trivial log_vars: exercises the folded exp(-lv) constants ---
    new_lv = jax.random.uniform(k_lv, (n_tasks,), dtype=jnp.float32) * 2.0 - 1.0
    mtl.set_log_vars(new_lv)
    out_none_lv = jax.block_until_ready(mtl(losses))
    ref_lv = _reference(losses, new_lv, is_regression)
    assert jnp.allclose(out_none_lv, ref_lv, atol=1e-5, rtol=1e-5)

    # --- 'sum' and 'mean' reductions (scalar outputs via SMEM) ---
    mtl_sum = MultiTaskLossPallas(is_regression, reduction="sum")
    mtl_mean = MultiTaskLossPallas(is_regression, reduction="mean")
    mtl_sum.set_log_vars(new_lv)
    mtl_mean.set_log_vars(new_lv)
    out_sum = jax.block_until_ready(mtl_sum(losses))
    out_mean = jax.block_until_ready(mtl_mean(losses))
    assert out_sum.shape == ()
    assert out_mean.shape == ()
    assert jnp.allclose(out_sum, jnp.sum(ref_lv), atol=1e-5, rtol=1e-5)
    assert jnp.allclose(out_mean, jnp.mean(ref_lv), atol=1e-5, rtol=1e-5)

    print("KERNEL_OK")
</pallas_src>

<mosaic_0001>
module attributes {stable_mosaic.version = 11 : i64} {
  func.func @_mtl_kernel_none(%arg0: memref<1x4xf32, #tpu.memory_space<vmem>>, %arg1: memref<1x4xf32, #tpu.memory_space<vmem>>, %arg2: memref<1x4xf32, #tpu.memory_space<vmem>>, %arg3: memref<1x4xf32, #tpu.memory_space<vmem>>) attributes {dimension_semantics = [], scalar_prefetch = 0 : i64, scratch_operands = 0 : i64, tpu.core_type = #tpu.core_type<tc>} {
    %c0 = arith.constant 0 : index
    %c0_0 = arith.constant 0 : index
    %0 = vector.load %arg0[%c0, %c0_0] : memref<1x4xf32, #tpu.memory_space<vmem>>, vector<1x4xf32>
    %c0_1 = arith.constant 0 : index
    %c0_2 = arith.constant 0 : index
    %1 = vector.load %arg1[%c0_1, %c0_2] : memref<1x4xf32, #tpu.memory_space<vmem>>, vector<1x4xf32>
    %2 = arith.mulf %0, %1 : vector<1x4xf32>
    %c0_3 = arith.constant 0 : index
    %c0_4 = arith.constant 0 : index
    %3 = vector.load %arg2[%c0_3, %c0_4] : memref<1x4xf32, #tpu.memory_space<vmem>>, vector<1x4xf32>
    %4 = arith.addf %2, %3 : vector<1x4xf32>
    %c0_5 = arith.constant 0 : index
    %c0_6 = arith.constant 0 : index
    %5 = vector.load %arg3[%c0_5, %c0_6] : memref<1x4xf32, #tpu.memory_space<vmem>>, vector<1x4xf32>
    tpu.vector_store %arg3[%c0_5, %c0_6], %4 {strides = array<i32>} : memref<1x4xf32, #tpu.memory_space<vmem>>, vector<1x4xf32>,
    return
  }
}

</mosaic_0001>

<llo_original>
// kernel: tpu_custom_call.1
$region0: #{tpu_custom_call.1}
  #allocation0 [shape = 'u32[]', space=smem, size = 0x4, offset = 0x4, fixed_abs, tag = 'smem constant byte address 0x4 - core index']
  #allocation1 [shape = 'u32[144,128]{1,0:T(1,128)}', space=vmem, size = 0x12000, scoped, tag = 'internal scratch']
  %s0 = inlined_call_operand.hbm [shape: f32[1,4], index: 0, kind: input, shape index: {}]
  %s1 = inlined_call_operand.vmem [shape: f32[1,4], index: 1, kind: input, shape index: {}]
  %s2 = inlined_call_operand.vmem [shape: f32[1,4], index: 2, kind: input, shape index: {}]
  %s3 = inlined_call_operand.hbm [shape: f32[1,4], index: 3, kind: output, shape index: {}]
  %s4 = sld [smem:[#allocation0]]
  $region26: #{tpu_custom_call.1} parent=0
    _
  %s6 = ssub.s32 1, %s4
  %s7 = scalar_select 0, %s6, %s4
  $region1: #{tpu_custom_call.1} parent=0
    #allocation2 [shape = 'u8[512]{0}', space=vmem, size = 0x400, scoped, tag = 'input window, operand 0, single buffered']
    #allocation3 [shape = 's32[1]{0}', space=sflag, size = 0x4, scoped, tag = 'scoped memory for tpu_custom_call.1']
    #allocation4 [shape = 's32[1]{0}', space=sflag, size = 0x4, scoped, tag = 'scoped memory for tpu_custom_call.1']
    #allocation5 [shape = 'u8[512]{0}', space=vmem, size = 0x400, scoped, tag = 'output window, operand 0, single buffered']
    %8 = vsyncpa [#allocation3], 0
    %9 = vsyncpa [#allocation4], 0
    // Predicated region
    $region2: #{tpu_custom_call.1} parent=1 // pred_check
      _
    $region3: #{tpu_custom_call.1} parent=1 // pred_check_branch
      %11 = sbr.rel (0) target = $region5
    $region4: #{tpu_custom_call.1} parent=1 // pred_region
      %s13 = ssub.s32 16, 16
      %14 = vsyncadd [#allocation3], %s13
      %s16 = sshll.u32 [#allocation2], 4
      %s17 = int_to_ptr.vmem [resolvable:$true] %s16
      %19 = dma.hbm_to_vmem [thread:$0]  %s0, 16, %s17, [#allocation3]
    $region5: #{tpu_custom_call.1} parent=1 // pred_fallthru
      _
    // Predicated region
    $region6: #{tpu_custom_call.1} parent=1 // pred_check
      _
    $region7: #{tpu_custom_call.1} parent=1 // pred_check_branch
      %21 = sbr.rel (0) target = $region9
    $region8: #{tpu_custom_call.1} parent=1 // pred_region
      _
    $region9: #{tpu_custom_call.1} parent=1 // pred_fallthru
      _
    // Predicated region
    $region10: #{tpu_custom_call.1} parent=1 // pred_check
      _
    $region11: #{tpu_custom_call.1} parent=1 // pred_check_branch
      %23 = sbr.rel (0) target = $region13
    $region12: #{tpu_custom_call.1} parent=1 // pred_region
      _
    $region13: #{tpu_custom_call.1} parent=1 // pred_fallthru
      _
    // Predicated region
    $region14: #{tpu_custom_call.1} parent=1 // pred_check
      _
    $region15: #{tpu_custom_call.1} parent=1 // pred_check_branch
      %25 = sbr.rel (0) target = $region17
    $region16: #{tpu_custom_call.1} parent=1 // pred_region
      %26 = dma.done [#allocation3], 16
    $region17: #{tpu_custom_call.1} parent=1 // pred_fallthru
      _
    %v27 = vld [vmem:[#allocation2] sm:$0x1]
    %v28 = vld [vmem:[%s1] sm:$0x1]
    %v29 = vmul.f32 %v27, %v28
    %v30 = vld [vmem:[%s2] sm:$0x1]
    %v31 = vadd.f32 %v29, %v30
    %vm32 = vcmask 24576
    %33 = vst.msk [vmem:[#allocation5] sm:$0x1] %vm32, %v31
    // Predicated region
    $region18: #{tpu_custom_call.1} parent=1 // pred_check
      _
    $region19: #{tpu_custom_call.1} parent=1 // pred_check_branch
      %35 = sbr.rel (0) target = $region21
    $region20: #{tpu_custom_call.1} parent=1 // pred_region
      %s37 = ssub.s32 16, 16
      %38 = vsyncadd [#allocation4], %s37
      %s40 = sshll.u32 [#allocation5], 4
      %s41 = int_to_ptr.vmem [resolvable:$true] %s40
      %43 = dma.vmem_to_hbm [thread:$0]  %s41, 16, %s3, [#allocation4]
    $region21: #{tpu_custom_call.1} parent=1 // pred_fallthru
      _
    // Predicated region
    $region22: #{tpu_custom_call.1} parent=1 // pred_check
      _
    $region23: #{tpu_custom_call.1} parent=1 // pred_check_branch
      %45 = sbr.rel (0) target = $region25
    $region24: #{tpu_custom_call.1} parent=1 // pred_region
      %46 = dma.done [#allocation4], 16
    $region25: #{tpu_custom_call.1} parent=1 // pred_fallthru
      _
    %47 = vsyncpa [#allocation3], 1
    %48 = vsyncpa [#allocation4], 1

</llo_original>
